<compile_context>
chip_gen: v6e
topology: v6e:2x2x1
jax: 0.10.0
libtpu: 0.0.40
codegen_flags: <defaults>
</compile_context>

<pallas_src>
import jax
import jax.numpy as jnp
from jax.experimental import pallas as pl
from jax.experimental.pallas import tpu as pltpu


FUSE_THRESHOLD = 1024  # keep the fully-resident fused matmul only while V*Cin <= this


# ---------------------------------------------------------------------------
# Kernels
# ---------------------------------------------------------------------------
def _fused_kernel(x_ref, m_ref, beta_ref, o_ref):
    """One NT-row tile: out = relu(x @ M + beta); residual is folded into M."""
    acc = jnp.dot(x_ref[...], m_ref[...], preferred_element_type=jnp.float32)
    acc = acc + beta_ref[...]                      # bias folded through A (f32)
    o_ref[...] = jnp.maximum(acc, 0.0).astype(o_ref.dtype)


def _tiled_kernel(x_ref, m_ref, beta_ref, o_ref, acc_ref):
    """Column + contraction tiled variant for large V*Cin (M never fully resident)."""
    k = pl.program_id(2)

    @pl.when(k == 0)
    def _():
        acc_ref[...] = jnp.zeros_like(acc_ref)

    acc_ref[...] += jnp.dot(x_ref[...], m_ref[...], preferred_element_type=jnp.float32)

    @pl.when(k == pl.num_programs(2) - 1)
    def _():
        o_ref[...] = jnp.maximum(acc_ref[...] + beta_ref[...], 0.0).astype(o_ref.dtype)


# ---------------------------------------------------------------------------
# Sizing helpers
# ---------------------------------------------------------------------------
def _round_up(x, m):
    return ((x + m - 1) // m) * m


def _vmem_limit_bytes():
    """~85% of physical VMEM: ~108 MiB on v5e/v6e (128 MiB), ~54 MiB on v7x (64 MiB)."""
    try:
        cap = int(pltpu.get_tpu_info().vmem_capacity_bytes)
    except Exception:
        cap = 64 * 1024 * 1024
    return int(cap * 0.85)


def _choose_tile_rows(nt, row_bytes, target_bytes=2 << 20):
    """Row-tile sized by row width (~2 MiB/tile), >=2 grid steps for v7x megacore."""
    tm = max(8, min(target_bytes // max(int(row_bytes), 1), 4096))
    if nt >= 16:
        tm = min(tm, nt // 2)          # keep >= 2 grid steps so both v7x TCs get work
    tm = min(tm, _round_up(nt, 8))     # never exceed the (padded) row count
    tm = max(8, (int(tm) // 8) * 8)    # sublane constraint
    return int(tm)


def _largest_col_tile(dim, cap=512):
    """Largest multiple of 128 that divides `dim` (dim is already a multiple of 128)."""
    best = 128
    t = 256
    while t <= min(cap, dim):
        if dim % t == 0:
            best = t
        t += 128
    return best


# ---------------------------------------------------------------------------
# Parameter fusion (tiny, done once per layer)
# ---------------------------------------------------------------------------
def _fuse_params(A, weight, bias, *, identity_residual):
    """Fold K adjacency slices, 1x1-conv weights, bias and the identity residual."""
    K, Cout, Cin = weight.shape
    _, V, _ = A.shape
    # M[v*Cin + c, w*Cout + o] = sum_k A[k, v, w] * W[k, o, c]
    M = jnp.einsum('kvw,koc->vcwo', A, weight).reshape(V * Cin, V * Cout)
    # beta[w*Cout + o] = sum_k (sum_v A[k, v, w]) * b[k, o]
    beta = jnp.einsum('kvw,ko->wo', A, bias).reshape(1, V * Cout)
    if identity_residual:
        # out = x @ (M + I) + beta  ==  (gcn output) + x   (requires Cin == Cout)
        M = M + jnp.eye(V * Cin, V * Cout, dtype=M.dtype)
    return M, beta


# ---------------------------------------------------------------------------
# Core 2D entry point (channels-last, lane-dense layout)
# ---------------------------------------------------------------------------
def st_gcn_apply_2d(x2d, M, beta, *, compute_dtype, out_dtype,
                    fuse_threshold=FUSE_THRESHOLD):
    """out2d = relu(x2d @ M + beta), M already contains the folded residual.

    x2d: (NT, V*Cin). Returns (NT, V*Cout_padded); caller slices columns to V*Cout.
    """
    NT, VCin = x2d.shape
    _, VCout = M.shape
    VCout_pad = _round_up(VCout, 128)          # lane-dense output stores

    beta = beta.astype(jnp.float32)
    if VCout_pad != VCout:
        M = jnp.pad(M, ((0, 0), (0, VCout_pad - VCout)))
        beta = jnp.pad(beta, ((0, 0), (0, VCout_pad - VCout)))

    itemsize = jnp.dtype(compute_dtype).itemsize
    vmem_limit = _vmem_limit_bytes()

    if VCin <= fuse_threshold:
        # ---- fused path: whole (V*Cin, V*Cout) matrix resident, single matmul ----
        x2d = x2d.astype(compute_dtype)
        M = M.astype(compute_dtype)
        tm = _choose_tile_rows(NT, max(VCin, VCout_pad) * itemsize)
        return pl.pallas_call(
            _fused_kernel,
            out_shape=jax.ShapeDtypeStruct((NT, VCout_pad), out_dtype),
            grid_spec=pltpu.PrefetchScalarGridSpec(
                num_scalar_prefetch=0,
                grid=(pl.cdiv(NT, tm),),
                in_specs=[
                    pl.BlockSpec((tm, VCin), lambda i: (i, 0)),
                    # constant-index operands: single-buffered (halves their VMEM)
                    pl.BlockSpec((VCin, VCout_pad), lambda i: (0, 0),
                                 pipeline_mode=pl.Buffered(1)),
                    pl.BlockSpec((1, VCout_pad), lambda i: (0, 0),
                                 pipeline_mode=pl.Buffered(1)),
                ],
                out_specs=pl.BlockSpec((tm, VCout_pad), lambda i: (i, 0)),
            ),
            compiler_params=pltpu.CompilerParams(
                dimension_semantics=("parallel",),   # megacore-shard NT on v7x
                vmem_limit_bytes=vmem_limit,
            ),
        )(x2d, M, beta)

    # ---- large V*Cin: column + contraction tiled matmul (M never fully resident) ----
    VCin_pad = _round_up(VCin, 128)
    if VCin_pad != VCin:
        # TODO(synk): this pads the activation columns (extra HBM traffic); at the channel
        # widths that reach this path V*Cin is normally already a multiple of 128.
        x2d = jnp.pad(x2d, ((0, 0), (0, VCin_pad - VCin)))
        M = jnp.pad(M, ((0, VCin_pad - VCin), (0, 0)))
    x2d = x2d.astype(compute_dtype)
    M = M.astype(compute_dtype)

    tk = _largest_col_tile(VCin_pad)
    tn = _largest_col_tile(VCout_pad)
    tm = _choose_tile_rows(NT, max(tk, tn) * itemsize)
    grid = (pl.cdiv(NT, tm), VCout_pad // tn, VCin_pad // tk)

    return pl.pallas_call(
        _tiled_kernel,
        out_shape=jax.ShapeDtypeStruct((NT, VCout_pad), out_dtype),
        grid_spec=pltpu.PrefetchScalarGridSpec(
            num_scalar_prefetch=0,
            grid=grid,
            in_specs=[
                pl.BlockSpec((tm, tk), lambda i, j, k: (i, k)),
                pl.BlockSpec((tk, tn), lambda i, j, k: (k, j)),
                pl.BlockSpec((1, tn), lambda i, j, k: (0, j)),
            ],
            out_specs=pl.BlockSpec((tm, tn), lambda i, j, k: (i, j)),
            scratch_shapes=[pltpu.VMEM((tm, tn), jnp.float32)],
        ),
        compiler_params=pltpu.CompilerParams(
            dimension_semantics=("parallel", "parallel", "arbitrary"),
            vmem_limit_bytes=vmem_limit,
        ),
    )(x2d, M, beta)


# ---------------------------------------------------------------------------
# PyTorch-module-shaped wrapper (NCTV in, NCTV out)
# ---------------------------------------------------------------------------
def st_gcn_forward(x_nctv, A, weight, bias, *, compute_dtype=jnp.float32,
                   out_dtype=None, fuse_threshold=FUSE_THRESHOLD):
    """x: (N, Cin, T, V), A: (K, V, V), weight: (K, Cout, Cin), bias: (K, Cout).
    Returns (relu(gcn(x, A) + x), A) like the PyTorch module."""
    N, Cin, T, V = x_nctv.shape
    K, Cout, _ = weight.shape
    assert A.shape == (K, V, V)
    assert Cin == Cout, "identity-residual configuration requires in_ch == out_ch"
    out_dtype = compute_dtype if out_dtype is None else out_dtype

    # Channels-last, lane-dense 2D activation: X2d[n*T + t, v*Cin + c] = x[n, c, t, v]
    # TODO(synk): keep this layout across layers in a real network (see header note).
    x2d = jnp.transpose(x_nctv, (0, 2, 3, 1)).reshape(N * T, V * Cin)

    M, beta = _fuse_params(A, weight, bias, identity_residual=True)
    out2d = st_gcn_apply_2d(x2d, M, beta, compute_dtype=compute_dtype,
                            out_dtype=out_dtype, fuse_threshold=fuse_threshold)
    out2d = out2d[:, :V * Cout]                      # drop lane padding (fuses w/ transpose)
    out_nctv = jnp.transpose(out2d.reshape(N, T, V, Cout), (0, 3, 1, 2))
    return out_nctv, A


def st_gcn_reference(x, A, weight, bias):
    """Pure-JAX reference mirroring the PyTorch forward."""
    N, Cin, T, V = x.shape
    K, Cout, _ = weight.shape
    w2 = weight.reshape(K * Cout, Cin)
    xc = jnp.einsum('oc,nctv->notv', w2, x) + bias.reshape(1, K * Cout, 1, 1)
    xc = xc.reshape(N, K, Cout, T, V)
    g = jnp.einsum('nkctv,kvw->nctw', xc, A)
    return jnp.maximum(g + x, 0.0), A


if __name__ == "__main__":
    key = jax.random.PRNGKey(0)

    # ---- config 1: small shapes (fused path), f32 + bf16 ----
    N, C, T, V, K = 2, 4, 16, 16, 3          # in_channels == out_channels == 4
    k1, k2, k3, k4, key = jax.random.split(key, 5)
    x = jax.random.normal(k1, (N, C, T, V), dtype=jnp.float32)
    A = jax.random.normal(k2, (K, V, V), dtype=jnp.float32) * 0.1
    weight = jax.random.normal(k3, (K, C, C), dtype=jnp.float32) * 0.1   # (K, Cout, Cin)
    bias = jax.random.normal(k4, (K, C), dtype=jnp.float32) * 0.01

    ref, _ = st_gcn_reference(x, A, weight, bias)

    out_f32, A_out = st_gcn_forward(x, A, weight, bias, compute_dtype=jnp.float32)
    out_f32 = jax.block_until_ready(out_f32)
    assert out_f32.shape == (N, C, T, V)
    assert jnp.allclose(out_f32, ref, rtol=1e-4, atol=1e-4), "f32 fused path mismatch"

    out_bf16, _ = st_gcn_forward(x, A, weight, bias, compute_dtype=jnp.bfloat16)
    out_bf16 = jax.block_until_ready(out_bf16)
    assert out_bf16.dtype == jnp.bfloat16
    assert jnp.allclose(out_bf16.astype(jnp.float32), ref, rtol=5e-2, atol=5e-2), \
        "bf16 fused path mismatch"

    # ---- config 2: wide channels (V*Cin = 2048 > FUSE_THRESHOLD) -> tiled fallback ----
    N2, C2, T2, V2 = 2, 64, 16, 32
    k1, k2, k3, k4, key = jax.random.split(key, 5)
    x2 = jax.random.normal(k1, (N2, C2, T2, V2), dtype=jnp.float32)
    A2 = jax.random.normal(k2, (K, V2, V2), dtype=jnp.float32) * 0.05
    w2 = jax.random.normal(k3, (K, C2, C2), dtype=jnp.float32) * 0.05
    b2 = jax.random.normal(k4, (K, C2), dtype=jnp.float32) * 0.01

    ref2, _ = st_gcn_reference(x2, A2, w2, b2)
    out2, _ = st_gcn_forward(x2, A2, w2, b2, compute_dtype=jnp.float32)
    out2 = jax.block_until_ready(out2)
    assert out2.shape == (N2, C2, T2, V2)
    assert jnp.allclose(out2, ref2, rtol=5e-3, atol=5e-3), "f32 tiled path mismatch"

    print("KERNEL_OK")
</pallas_src>

<mosaic_0001>
module attributes {stable_mosaic.version = 11 : i64} {
  func.func @_fused_kernel(%arg0: i32, %arg1: memref<16x64xf32, #tpu.memory_space<vmem>>, %arg2: memref<64x128xf32, #tpu.memory_space<vmem>>, %arg3: memref<1x128xf32, #tpu.memory_space<vmem>>, %arg4: memref<16x128xf32, #tpu.memory_space<vmem>>) attributes {dimension_semantics = [#tpu.dimension_semantics<parallel>], iteration_bounds = array<i64: 2>, scalar_prefetch = 0 : i64, scratch_operands = 0 : i64, tpu.core_type = #tpu.core_type<tc>, window_params = [{transform_indices = @transform_0, window_bounds = array<i64: 16, 64>}, {pipeline_mode = #tpu.pipeline_mode<synchronous>, transform_indices = @transform_1, window_bounds = array<i64: 64, 128>}, {pipeline_mode = #tpu.pipeline_mode<synchronous>, transform_indices = @transform_2, window_bounds = array<i64: 1, 128>}, {transform_indices = @transform_3, window_bounds = array<i64: 16, 128>}]} {
    %c0 = arith.constant 0 : index
    %c0_0 = arith.constant 0 : index
    %0 = vector.load %arg1[%c0, %c0_0] : memref<16x64xf32, #tpu.memory_space<vmem>>, vector<16x64xf32>
    %c0_1 = arith.constant 0 : index
    %c0_2 = arith.constant 0 : index
    %1 = vector.load %arg2[%c0_1, %c0_2] : memref<64x128xf32, #tpu.memory_space<vmem>>, vector<64x128xf32>
    %cst = arith.constant dense<0.000000e+00> : vector<16x128xf32>
    %2 = tpu.matmul %0, %1, %cst {dimension_numbers = #tpu.dot_dimension_numbers<[1], [0], [0], [1], [0, 0, 1, 1], [], []>} : vector<16x64xf32>, vector<64x128xf32>, vector<16x128xf32> -> vector<16x128xf32>
    %c0_3 = arith.constant 0 : index
    %c0_4 = arith.constant 0 : index
    %3 = vector.load %arg3[%c0_3, %c0_4] : memref<1x128xf32, #tpu.memory_space<vmem>>, vector<1x128xf32>
    %4 = vector.broadcast %3 : vector<1x128xf32> to vector<16x128xf32>
    %5 = arith.addf %2, %4 : vector<16x128xf32>
    %cst_5 = arith.constant 0.000000e+00 : f32
    %6 = vector.broadcast %cst_5 : f32 to vector<16x128xf32>
    %7 = arith.maximumf %5, %6 : vector<16x128xf32>
    %c0_6 = arith.constant 0 : index
    %c0_7 = arith.constant 0 : index
    %8 = vector.load %arg4[%c0_6, %c0_7] : memref<16x128xf32, #tpu.memory_space<vmem>>, vector<16x128xf32>
    tpu.vector_store %arg4[%c0_6, %c0_7], %7 {strides = array<i32>} : memref<16x128xf32, #tpu.memory_space<vmem>>, vector<16x128xf32>,
    return
  }
  func.func @transform_0(%arg0: i32) -> (i32, i32) {
    %c0_i32 = arith.constant 0 : i32
    %c0_i32_0 = arith.constant 0 : i32
    return %arg0, %c0_i32 : i32, i32
  }
  func.func @transform_1(%arg0: i32) -> (i32, i32) {
    %c0_i32 = arith.constant 0 : i32
    %c0_i32_0 = arith.constant 0 : i32
    %c0_i32_1 = arith.constant 0 : i32
    return %c0_i32, %c0_i32_0 : i32, i32
  }
  func.func @transform_2(%arg0: i32) -> (i32, i32) {
    %c0_i32 = arith.constant 0 : i32
    %c0_i32_0 = arith.constant 0 : i32
    %c0_i32_1 = arith.constant 0 : i32
    return %c0_i32, %c0_i32_0 : i32, i32
  }
  func.func @transform_3(%arg0: i32) -> (i32, i32) {
    %c0_i32 = arith.constant 0 : i32
    %c0_i32_0 = arith.constant 0 : i32
    return %arg0, %c0_i32 : i32, i32
  }
}

</mosaic_0001>

<llo_original>
// kernel: tpu_custom_call.1
$region0: #{tpu_custom_call.1}
  #allocation0 [shape = 'u32[]', space=smem, size = 0x4, offset = 0x4, fixed_abs, tag = 'smem constant byte address 0x4 - core index']
  #allocation1 [shape = 'u32[144,128]{1,0:T(1,128)}', space=vmem, size = 0x12000, scoped, tag = 'internal scratch']
  %s0 = inlined_call_operand.hbm [shape: f32[32,64], index: 0, kind: input, shape index: {}]
  %s1 = inlined_call_operand.hbm [shape: f32[64,128], index: 1, kind: input, shape index: {}]
  %s2 = inlined_call_operand.vmem [shape: f32[1,128], index: 2, kind: input, shape index: {}]
  %s3 = inlined_call_operand.hbm [shape: f32[32,128], index: 3, kind: output, shape index: {}]
  %s4 = sld [smem:[#allocation0]]
  $region53: #{tpu_custom_call.1} parent=0
    _
  %s6 = ssub.s32 1, %s4
  %s7 = scalar_select 0, %s6, %s4
  $region1: #{tpu_custom_call.1} parent=0
    #allocation2 [shape = 'u8[16384]{0}', space=vmem, size = 0x4000, scoped, tag = 'input window, operand 0']
    #allocation3 [shape = 's32[2]{0}', space=sflag, size = 0x8, scoped, tag = 'scoped memory for tpu_custom_call.1']
    #allocation4 [shape = 's32[2]{0}', space=sflag, size = 0x8, scoped, tag = 'scoped memory for tpu_custom_call.1']
    #allocation5 [shape = 'u8[32768]{0}', space=vmem, size = 0x8000, scoped, tag = 'input window, operand 1, single buffered']
    #allocation6 [shape = 's32[1]{0}', space=sflag, size = 0x4, scoped, tag = 'scoped memory for tpu_custom_call.1']
    #allocation7 [shape = 'u8[16384]{0}', space=vmem, size = 0x4000, scoped, tag = 'output window, operand 0']
    %8 = vsyncpa [#allocation3], 0
    %s9 = scalar_lea.sflag [#allocation3], 1
    %10 = vsyncpa %s9, 0
    %11 = vsyncpa [#allocation6], 0
    %12 = vsyncpa [#allocation4], 0
    %s13 = scalar_lea.sflag [#allocation4], 1
    %14 = vsyncpa %s13, 0
    loop: start=0, step=1, limit=4
    $region2: #{tpu_custom_call.1} parent=1 // loop_pre_header
      _
    $region3: #{tpu_custom_call.1} parent=1 // loop_header
      %s16 = sphi 0, %s20
      %p17 = scmp.ge.s32.totalorder %s16, 4
      %s26 = sphi 0, %s28
      %s29 = sphi 0, %s26
      %s30 = sphi 0, %s29
      %s46 = sphi 0, %s30
      %s50 = sphi 0, %s50
      %s52 = sphi 0, %s50
      %s53 = sphi 0, %s52
      %s67 = sphi 0, %s53
      %s71 = sphi 0, %s71
      %s73 = sphi 0, %s71
      %s74 = sphi 0, %s73
      %s88 = sphi 0, %s74
      %s94 = sphi 0, %s96
      %s97 = sphi 0, %s94
      %s98 = sphi 0, %s97
      %s114 = sphi 0, %s98
    $region4: #{tpu_custom_call.1} parent=1 // loop_header_branch
      %19 = sbr.rel (%p17) target = $region8
    $region5: #{tpu_custom_call.1} parent=1 // loop_body
      %s21 = ssub.s32 %s16, 1
      %s22 = ssub.s32 %s16, 2
      %s23 = sadd.s32 %s16, 1
      %s24 = ssub.s32 %s16, %s23
      %p25 = scmp.eq.s32.totalorder %s24, 0
      %s27 = sadd.s32 %s26, 1
      %s28 = scalar_select %p25, %s26, %s27
      %p31 = pneg %p25
      %p32 = scmp.eq.s32.totalorder %s16, 1
      %p33 = por %p31, %p32
      %p34 = scmp.ne.s32.totalorder %s26, %s29
      %p35 = scmp.eq.s32.totalorder %s16, 0
      %p36 = por %p34, %p35
      %p37 = scmp.ne.s32.totalorder %s26, %s29
      %p38 = scmp.eq.s32.totalorder %s21, 1
      %p39 = por %p37, %p38
      %p40 = scmp.ne.s32.totalorder %s29, %s30
      %p41 = scmp.eq.s32.totalorder %s21, 0
      %p42 = por %p40, %p41
      %p43 = scmp.ne.s32.totalorder %s29, %s30
      %p44 = scmp.eq.s32.totalorder %s22, 1
      %p45 = por %p43, %p44
      %p47 = scmp.ne.s32.totalorder %s30, %s46
      %p48 = scmp.eq.s32.totalorder %s22, 0
      %p49 = por %p47, %p48
      %s51 = sadd.s32 %s50, 1
      %p54 = scmp.eq.s32.totalorder %s16, 1
      %p55 = scmp.ne.s32.totalorder %s50, %s52
      %p56 = scmp.eq.s32.totalorder %s16, 0
      %p57 = por %p55, %p56
      %p58 = scmp.ne.s32.totalorder %s50, %s52
      %p59 = scmp.eq.s32.totalorder %s21, 1
      %p60 = por %p58, %p59
      %p61 = scmp.ne.s32.totalorder %s52, %s53
      %p62 = scmp.eq.s32.totalorder %s21, 0
      %p63 = por %p61, %p62
      %p64 = scmp.ne.s32.totalorder %s52, %s53
      %p65 = scmp.eq.s32.totalorder %s22, 1
      %p66 = por %p64, %p65
      %p68 = scmp.ne.s32.totalorder %s53, %s67
      %p69 = scmp.eq.s32.totalorder %s22, 0
      %p70 = por %p68, %p69
      %s72 = sadd.s32 %s71, 1
      %p75 = scmp.eq.s32.totalorder %s16, 1
      %p76 = scmp.ne.s32.totalorder %s71, %s73
      %p77 = scmp.eq.s32.totalorder %s16, 0
      %p78 = por %p76, %p77
      %p79 = scmp.ne.s32.totalorder %s71, %s73
      %p80 = scmp.eq.s32.totalorder %s21, 1
      %p81 = por %p79, %p80
      %p82 = scmp.ne.s32.totalorder %s73, %s74
      %p83 = scmp.eq.s32.totalorder %s21, 0
      %p84 = por %p82, %p83
      %p85 = scmp.ne.s32.totalorder %s73, %s74
      %p86 = scmp.eq.s32.totalorder %s22, 1
      %p87 = por %p85, %p86
      %p89 = scmp.ne.s32.totalorder %s74, %s88
      %p90 = scmp.eq.s32.totalorder %s22, 0
      %p91 = por %p89, %p90
      %s92 = ssub.s32 %s16, %s23
      %p93 = scmp.eq.s32.totalorder %s92, 0
      %s95 = sadd.s32 %s94, 1
      %s96 = scalar_select %p93, %s94, %s95
      %p99 = pneg %p93
      %p100 = scmp.eq.s32.totalorder %s16, 1
      %p101 = por %p99, %p100
      %p102 = scmp.ne.s32.totalorder %s94, %s97
      %p103 = scmp.eq.s32.totalorder %s16, 0
      %p104 = por %p102, %p103
      %p105 = scmp.ne.s32.totalorder %s94, %s97
      %p106 = scmp.eq.s32.totalorder %s21, 1
      %p107 = por %p105, %p106
      %p108 = scmp.ne.s32.totalorder %s97, %s98
      %p109 = scmp.eq.s32.totalorder %s21, 0
      %p110 = por %p108, %p109
      %p111 = scmp.ne.s32.totalorder %s97, %s98
      %p112 = scmp.eq.s32.totalorder %s22, 1
      %p113 = por %p111, %p112
      %p115 = scmp.ne.s32.totalorder %s98, %s114
      %p116 = scmp.eq.s32.totalorder %s22, 0
      %p117 = por %p115, %p116
      %p118 = scmp.le.s32.totalorder 1, %s16
      %p119 = scmp.lt.s32.totalorder %s16, 3
      %p120 = pnand %p118, %p119
      %p121 = pneg %p120
      // Predicated region
      $region9: #{tpu_custom_call.1} parent=5 // pred_check
        _
      $region10: #{tpu_custom_call.1} parent=5 // pred_check_branch
        %123 = sbr.rel (%p120) target = $region12
      $region11: #{tpu_custom_call.1} parent=5 // pred_region
        %s124 = ssub.s32 %s16, 1
        // Predicated region
        $region13: #{tpu_custom_call.1} parent=11 // pred_check
          %p125 = pneg %p63
        $region14: #{tpu_custom_call.1} parent=11 // pred_check_branch
          %127 = sbr.rel (%p125) target = $region16
        $region15: #{tpu_custom_call.1} parent=11 // pred_region
          %s129 = ssub.s32 1024, 1024
          %130 = vsyncadd [#allocation6], %s129
          %s131 = sshll.u32 [#allocation5], 4
          %s132 = int_to_ptr.vmem [resolvable:$true] %s131
          %137 = dma.hbm_to_vmem [thread:$0]  %s1, 1024, %s132, [#allocation6], 128, 128, 8
        $region16: #{tpu_custom_call.1} parent=11 // pred_fallthru
          _
        // Predicated region
        $region17: #{tpu_custom_call.1} parent=11 // pred_check
          %p138 = pneg %p84
        $region18: #{tpu_custom_call.1} parent=11 // pred_check_branch
          %140 = sbr.rel (%p138) target = $region20
        $region19: #{tpu_custom_call.1} parent=11 // pred_region
          _
        $region20: #{tpu_custom_call.1} parent=11 // pred_fallthru
          _
      $region12: #{tpu_custom_call.1} parent=5 // pred_fallthru
        _
      %p141 = scmp.lt.s32.totalorder %s16, 2
      // Predicated region
      $region21: #{tpu_custom_call.1} parent=5 // pred_check
        %p142 = pneg %p141
      $region22: #{tpu_custom_call.1} parent=5 // pred_check_branch
        %144 = sbr.rel (%p142) target = $region24
      $region23: #{tpu_custom_call.1} parent=5 // pred_region
        // Predicated region
        $region25: #{tpu_custom_call.1} parent=23 // pred_check
          %p145 = pneg %p36
        $region26: #{tpu_custom_call.1} parent=23 // pred_check_branch
          %147 = sbr.rel (%p145) target = $region28
        $region27: #{tpu_custom_call.1} parent=23 // pred_region
          %s148 = sand.u32 %s26, 1
          %s149 = scalar_lea.sflag [#allocation3], %s148
          %s150 = sand.u32 %s26, 1
          %s151 = smul.addr %s150, 16
          %s152 = scalar_lea.vmem [#allocation2], %s151
          %s153 = smul.u32 2, %s16
          %s155 = ssub.s32 256, 256
          %156 = vsyncadd %s149, %s155
          %s157 = smul.addr %s153, 128
          %s158 = scalar_lea.hbm %s0, %s157
          %s159 = sshll.u32 %s152, 4
          %s160 = int_to_ptr.vmem [resolvable:$true] %s159
          %165 = dma.hbm_to_vmem [thread:$0]  %s158, 256, %s160, %s149, 128, 128, 8
        $region28: #{tpu_custom_call.1} parent=23 // pred_fallthru
          _
      $region24: #{tpu_custom_call.1} parent=5 // pred_fallthru
        _
      %p166 = scmp.le.s32.totalorder 1, %s16
      %p167 = scmp.lt.s32.totalorder %s16, 3
      %p168 = pnand %p166, %p167
      %p169 = pneg %p168
      // Predicated region
      $region29: #{tpu_custom_call.1} parent=5 // pred_check
        _
      $region30: #{tpu_custom_call.1} parent=5 // pred_check_branch
        %171 = sbr.rel (%p168) target = $region32
      $region31: #{tpu_custom_call.1} parent=5 // pred_region
        %s172 = ssub.s32 %s16, 1
        %s173 = sand.u32 %s29, 1
        %s174 = scalar_lea.sflag [#allocation3], %s173
        %s175 = sand.u32 %s29, 1
        %s176 = smul.addr %s175, 16
        %s177 = scalar_lea.vmem [#allocation2], %s176
        // Predicated region
        $region33: #{tpu_custom_call.1} parent=31 // pred_check
          %p178 = pneg %p42
        $region34: #{tpu_custom_call.1} parent=31 // pred_check_branch
          %180 = sbr.rel (%p178) target = $region36
        $region35: #{tpu_custom_call.1} parent=31 // pred_region
          %181 = dma.done %s174, 256
        $region36: #{tpu_custom_call.1} parent=31 // pred_fallthru
          _
        // Predicated region
        $region37: #{tpu_custom_call.1} parent=31 // pred_check
          %p182 = pneg %p63
        $region38: #{tpu_custom_call.1} parent=31 // pred_check_branch
          %184 = sbr.rel (%p182) target = $region40
        $region39: #{tpu_custom_call.1} parent=31 // pred_region
          %185 = dma.done [#allocation6], 1024
        $region40: #{tpu_custom_call.1} parent=31 // pred_fallthru
          _
        %s186 = sand.u32 %s29, 1
        %s187 = scalar_lea.sflag [#allocation3], %s186
        %s188 = sand.u32 %s29, 1
        %s189 = smul.addr %s188, 16
        %s190 = scalar_lea.vmem [#allocation2], %s189
        %p191 = pneg %p42
        %p192 = pneg %p39
        %p193 = pneg %p63
        %p194 = pneg %p60
        %p195 = pneg %p84
        %p196 = pneg %p81
        %p197 = pneg %p110
        %p198 = pneg %p107
        %s199 = sand.u32 %s97, 1
        %s200 = scalar_lea.sflag [#allocation4], %s199
        %s201 = sand.u32 %s97, 1
        %s202 = smul.addr %s201, 16
        %s203 = scalar_lea.vmem [#allocation7], %s202
        %s204 = smul.u32 2, %s21
        %s205 = smul.u32 2, %s21
        %v206 = vld [vmem:[%s177] sm:$0xff]
        %v207 = vld [vmem:[%s177 + $0x8] sm:$0xff]
        %v208 = vld [vmem:[#allocation5] sm:$0xff]
        %v209 = vld [vmem:[#allocation5 + $0x8] sm:$0xff]
        %v210 = vld [vmem:[#allocation5 + $0x10] sm:$0xff]
        %v211 = vld [vmem:[#allocation5 + $0x18] sm:$0xff]
        %v212 = vld [vmem:[#allocation5 + $0x20] sm:$0xff]
        %v213 = vld [vmem:[#allocation5 + $0x28] sm:$0xff]
        %v214 = vld [vmem:[#allocation5 + $0x30] sm:$0xff]
        %v215 = vld [vmem:[#allocation5 + $0x38] sm:$0xff]
        %v216 = vld [vmem:[%s2] sm:$0x1]
        %v218 = vlaneseq
        %v219 = vshrl.u32 %v218, 7
        %v220 = vsub.s32 0, %v219
        %v221 = vrot.slane %v216, %v220
        %vm223 = vcmask 523264
        %v225 = vsel %vm223, %v206, 0
        %v228 = vsel %vm223, %v207, 0
        %230 = vmatprep.subr.mxu0 0.0
        %231 = vmatpush1.msra.mxu0 0.0
        %232 = vmatprep.subr.mxu0 0.0
        %233 = vmatpush1.msra.mxu0 0.0
        %234 = vmatprep.subr.mxu0 0.0
        %235 = vmatpush1.msra.mxu0 0.0
        %236 = vmatprep.subr.mxu0 0.0
        %237 = vmatpush1.msra.mxu0 0.0
        %238 = vmatprep.subr.mxu0 0.0
        %239 = vmatpush1.msra.mxu0 0.0
        %240 = vmatprep.subr.mxu0 0.0
        %241 = vmatpush1.msra.mxu0 0.0
        %242 = vmatprep.subr.mxu0 0.0
        %243 = vmatpush1.msra.mxu0 0.0
        %244 = vmatprep.subr.mxu0 0.0
        %245 = vmatpush1.msra.mxu0 0.0
        %246 = vmatprep.subr.mxu0 0.0
        %247 = vmatpush1.msra.mxu0 %v215
        %248 = vmatprep.subr.mxu0 0.0
        %249 = vmatpush1.msra.mxu0 %v214
        %250 = vmatprep.subr.mxu0 0.0
        %251 = vmatpush1.msra.mxu0 %v213
        %252 = vmatprep.subr.mxu0 0.0
        %253 = vmatpush1.msra.mxu0 %v212
        %254 = vmatprep.subr.mxu0 0.0
        %255 = vmatpush1.msra.mxu0 %v211
        %256 = vmatprep.subr.mxu0 0.0
        %257 = vmatpush1.msra.mxu0 %v210
        %258 = vmatprep.subr.mxu0 0.0
        %259 = vmatpush1.msra.mxu0 %v209
        %260 = vmatprep.subr.mxu0 0.0
        %261 = vmatpush1.msra.mxu0 %v208
        %262 = vmatprep.subr.mxu0 0.0
        %263 = vmatpush2.msra.mxu0 0.0
        %264 = vmatprep.subr.mxu0 0.0
        %265 = vmatpush2.msra.mxu0 0.0
        %266 = vmatprep.subr.mxu0 0.0
        %267 = vmatpush2.msra.mxu0 0.0
        %268 = vmatprep.subr.mxu0 0.0
        %269 = vmatpush2.msra.mxu0 0.0
        %270 = vmatprep.subr.mxu0 0.0
        %271 = vmatpush2.msra.mxu0 0.0
        %272 = vmatprep.subr.mxu0 0.0
        %273 = vmatpush2.msra.mxu0 0.0
        %274 = vmatprep.subr.mxu0 0.0
        %275 = vmatpush2.msra.mxu0 0.0
        %276 = vmatprep.subr.mxu0 0.0
        %277 = vmatpush2.msra.mxu0 0.0
        %278 = vmatprep.subr.mxu0 0.0
        %279 = vmatpush2.msra.mxu0 0.0
        %280 = vmatprep.subr.mxu0 0.0
        %281 = vmatpush2.msra.mxu0 0.0
        %282 = vmatprep.subr.mxu0 0.0
        %283 = vmatpush2.msra.mxu0 0.0
        %284 = vmatprep.subr.mxu0 0.0
        %285 = vmatpush2.msra.mxu0 0.0
        %286 = vmatprep.subr.mxu0 0.0
        %287 = vmatpush2.msra.mxu0 0.0
        %288 = vmatprep.subr.mxu0 0.0
        %289 = vmatpush2.msra.mxu0 0.0
        %290 = vmatprep.subr.mxu0 0.0
        %291 = vmatpush2.msra.mxu0 0.0
        %292 = vmatprep.subr.mxu0 0.0
        %293 = vmatpush2.msra.mxu0 0.0
        %294 = vmatprep.mubr.f32.mxu0 0.0
        %295 = vmatmul.mubr.f32.gmra.mxu0 %v225
        %v296 = vpop.f32.mrf.mxu0
        %v297 = vadd.f32 %v221, %v296
        %v298 = vpop.f32.mrf.mxu0
        %299 = vmatprep.mubr.f32.mxu0 0.0
        %300 = vmatmul.mubr.f32.gmra.mxu0 %v228
        %v301 = vpop.f32.mrf.mxu0
        %v302 = vadd.f32 %v221, %v301
        %v303 = vpop.f32.mrf.mxu0
        %304 = vdwg.mxu0
        %v305 = vmax.f32 %v297, 0.0
        %v306 = vmax.f32 %v302, 0.0
        %307 = vst [vmem:[%s203] sm:$0xff] %v305
        %308 = vst [vmem:[%s203 + $0x8] sm:$0xff] %v306
        %s309 = sand.u32 %s97, 1
        %s310 = scalar_lea.sflag [#allocation4], %s309
        %s311 = sand.u32 %s97, 1
        %s312 = smul.addr %s311, 16
        %s313 = scalar_lea.vmem [#allocation7], %s312
        // Predicated region
        $region41: #{tpu_custom_call.1} parent=31 // pred_check
          %p314 = pneg %p107
        $region42: #{tpu_custom_call.1} parent=31 // pred_check_branch
          %316 = sbr.rel (%p314) target = $region44
        $region43: #{tpu_custom_call.1} parent=31 // pred_region
          %s317 = smul.u32 2, %s21
          %s319 = ssub.s32 256, 256
          %320 = vsyncadd %s310, %s319
          %s321 = smul.addr %s317, 128
          %s322 = scalar_lea.hbm %s3, %s321
          %s323 = sshll.u32 %s313, 4
          %s324 = int_to_ptr.vmem [resolvable:$true] %s323
          %329 = dma.vmem_to_hbm [thread:$0]  %s324, 256, %s322, %s310, 128, 128, 8
        $region44: #{tpu_custom_call.1} parent=31 // pred_fallthru
          _
      $region32: #{tpu_custom_call.1} parent=5 // pred_fallthru
        _
      %p330 = scmp.le.s32.totalorder 2, %s16
      // Predicated region
      $region45: #{tpu_custom_call.1} parent=5 // pred_check
        %p331 = pneg %p330
      $region46: #{tpu_custom_call.1} parent=5 // pred_check_branch
        %333 = sbr.rel (%p331) target = $region48
      $region47: #{tpu_custom_call.1} parent=5 // pred_region
        %s334 = ssub.s32 %s16, 2
        // Predicated region
        $region49: #{tpu_custom_call.1} parent=47 // pred_check
          %p335 = pneg %p113
        $region50: #{tpu_custom_call.1} parent=47 // pred_check_branch
          %337 = sbr.rel (%p335) target = $region52
        $region51: #{tpu_custom_call.1} parent=47 // pred_region
          %s338 = sand.u32 %s98, 1
          %s339 = scalar_lea.sflag [#allocation4], %s338
          %s340 = sand.u32 %s98, 1
          %s341 = smul.addr %s340, 16
          %s342 = scalar_lea.vmem [#allocation7], %s341
          %343 = dma.done %s339, 256
        $region52: #{tpu_custom_call.1} parent=47 // pred_fallthru
          _
      $region48: #{tpu_custom_call.1} parent=5 // pred_fallthru
        _
    $region6: #{tpu_custom_call.1} parent=1 // loop_footer
      %s20 = sadd.s32 1, %s16
    $region7: #{tpu_custom_call.1} parent=1 // loop_footer_branch
      %15 = sbr.rel target = $region3
    $region8: #{tpu_custom_call.1} parent=1 // loop_exit
      _
    %344 = vsyncpa [#allocation3], 1
    %s345 = scalar_lea.sflag [#allocation3], 1
    %346 = vsyncpa %s345, 1
    %347 = vsyncpa [#allocation6], 1
    %348 = vsyncpa [#allocation4], 1
    %s349 = scalar_lea.sflag [#allocation4], 1
    %350 = vsyncpa %s349, 1

</llo_original>
